<compile_context>
chip_gen: v7x
topology: tpu7x:2x2x1
jax: 0.10.0
libtpu: 0.0.40
codegen_flags: <defaults>
</compile_context>

<pallas_src>
import functools

import jax
import jax.numpy as jnp
from jax.experimental import pallas as pl
from jax.experimental.pallas import tpu as pltpu


def _round_up(n, m):
    return (n + m - 1) // m * m


def ppo_policy_kernel(x_ref, w1_ref, w2_ref, wh_ref, b_ref, out_ref, *, out_dim):
    hidden_dim = w1_ref.shape[1]
    head_pad = out_ref.shape[-1]

    x = x_ref[...]                        # [TB, input_dim] bf16 (cast in wrapper)
    biases = b_ref[...]                   # [3, bias_width]  f32
    b1 = biases[0:1, :hidden_dim]
    b2 = biases[1:2, :hidden_dim]
    bh = biases[2:3, :head_pad]

    # fc1 + ReLU : bf16 MXU operands, f32 accumulation, f32 elementwise.
    h1 = jnp.dot(x, w1_ref[...], preferred_element_type=jnp.float32) + b1
    h1 = jnp.maximum(h1, 0.0)

    # fc2 + ReLU
    h2 = jnp.dot(h1.astype(jnp.bfloat16), w2_ref[...],
                 preferred_element_type=jnp.float32) + b2
    h2 = jnp.maximum(h2, 0.0)

    # Fused heads: one [hidden, HEAD_PAD] matmul.
    #   lanes [0, out_dim)          -> tanh  (mean)
    #   lanes [out_dim, 2*out_dim)  -> exp   (std)
    #   remaining lanes             -> padding (discarded by the wrapper)
    head = jnp.dot(h2.astype(jnp.bfloat16), wh_ref[...],
                   preferred_element_type=jnp.float32) + bh
    col = jax.lax.broadcasted_iota(jnp.int32, head.shape, dimension=1)
    out = jnp.where(col < out_dim, jnp.tanh(head), jnp.exp(head))
    out_ref[...] = out.astype(out_ref.dtype)   # bf16 lane-dense store


def prepare_params(params, out_dim):
    """Pack f32 [in,out] weights / [1,out] biases into the fused bf16 layout."""
    hidden_dim = params["w1"].shape[1]
    head_pad = max(128, _round_up(2 * out_dim, 128))
    bias_width = max(hidden_dim, head_pad)

    w1 = params["w1"].astype(jnp.bfloat16)
    w2 = params["w2"].astype(jnp.bfloat16)

    wh = jnp.concatenate([params["wm"], params["ws"]], axis=1)           # [H, 2*out]
    wh = jnp.pad(wh, ((0, 0), (0, head_pad - 2 * out_dim))).astype(jnp.bfloat16)

    bh = jnp.concatenate([params["bm"], params["bs"]], axis=1)           # [1, 2*out]
    bh = jnp.pad(bh, ((0, 0), (0, head_pad - 2 * out_dim)))

    def pad_bias(b):
        return jnp.pad(b, ((0, 0), (0, bias_width - b.shape[1])))

    biases = jnp.concatenate(
        [pad_bias(params["b1"]), pad_bias(params["b2"]), pad_bias(bh)], axis=0)

    return dict(w1=w1, w2=w2, wh=wh, biases=biases,
                hidden_dim=hidden_dim, out_dim=out_dim, head_pad=head_pad)


def _choose_tile(B, block_batch):
    """Pick (tb, b_pad): batch tile and padded batch length.

    * tb as large as possible (fewer grid steps), but capped so the grid has
      >= 2 steps whenever B >= 16 (v7x: 'parallel' axis shards over both TCs).
    * prefer tb that divides the 8-aligned batch so no pad copy / wasted rows;
      fall back to padding only for pathological divisor structure.
    """
    desired = max(8, min(_round_up(block_batch, 8), _round_up(B, 8)))
    if B >= 16:
        desired = min(desired, max(8, _round_up(pl.cdiv(B, 2), 8)))
    if B <= desired:
        return B, B                      # single full-batch block, no padding
    b8 = _round_up(B, 8)
    tb = 8
    for cand in range(desired, 7, -8):
        if b8 % cand == 0:
            tb = cand
            break
    if tb < max(8, desired // 4):        # no good divisor: accept padded rows
        tb = desired
    return tb, _round_up(b8, tb)


def ppo_policy_forward(x, packed, *, block_batch=1024):
    """x: [B, input_dim]. Returns (mean, std), each [B, out_dim] f32."""
    B, input_dim = x.shape
    hidden_dim = packed["hidden_dim"]
    out_dim = packed["out_dim"]
    head_pad = packed["head_pad"]
    bias_shape = packed["biases"].shape

    x = x.astype(jnp.bfloat16)           # halve the x HBM read; MXU is bf16 anyway
    tb, b_pad = _choose_tile(B, block_batch)
    if b_pad != B:
        x = jnp.pad(x, ((0, b_pad - B), (0, 0)))
    grid = (b_pad // tb,)

    kernel = functools.partial(ppo_policy_kernel, out_dim=out_dim)

    out = pl.pallas_call(
        kernel,
        out_shape=jax.ShapeDtypeStruct((b_pad, head_pad), jnp.bfloat16),
        grid=grid,
        in_specs=[
            pl.BlockSpec((tb, input_dim), lambda i: (i, 0)),          # x tile
            pl.BlockSpec((input_dim, hidden_dim), lambda i: (0, 0)),  # w1 (resident)
            pl.BlockSpec((hidden_dim, hidden_dim), lambda i: (0, 0)), # w2 (resident)
            pl.BlockSpec((hidden_dim, head_pad), lambda i: (0, 0)),   # fused head w
            pl.BlockSpec(bias_shape, lambda i: (0, 0)),               # packed biases
        ],
        out_specs=pl.BlockSpec((tb, head_pad), lambda i: (i, 0)),
        compiler_params=pltpu.CompilerParams(
            dimension_semantics=("parallel",)),
    )(x, packed["w1"], packed["w2"], packed["wh"], packed["biases"])

    mean = out[:B, :out_dim].astype(jnp.float32)
    std = out[:B, out_dim:2 * out_dim].astype(jnp.float32)
    return mean, std


def init_params(key, input_dim, output_dim, hidden_dim=128):
    """nn.Linear-style uniform(-1/sqrt(fan_in), 1/sqrt(fan_in)) init, f32."""
    def linear(k, fan_in, fan_out):
        kw, kb = jax.random.split(k)
        bound = 1.0 / jnp.sqrt(jnp.float32(fan_in))
        w = jax.random.uniform(kw, (fan_in, fan_out), jnp.float32, -bound, bound)
        b = jax.random.uniform(kb, (1, fan_out), jnp.float32, -bound, bound)
        return w, b

    k1, k2, k3, k4 = jax.random.split(key, 4)
    w1, b1 = linear(k1, input_dim, hidden_dim)
    w2, b2 = linear(k2, hidden_dim, hidden_dim)
    wm, bm = linear(k3, hidden_dim, output_dim)
    ws, bs = linear(k4, hidden_dim, output_dim)
    return dict(w1=w1, b1=b1, w2=w2, b2=b2, wm=wm, bm=bm, ws=ws, bs=bs)


def reference_forward_f32(x, p):
    h1 = jnp.maximum(x @ p["w1"] + p["b1"], 0.0)
    h2 = jnp.maximum(h1 @ p["w2"] + p["b2"], 0.0)
    mean = jnp.tanh(h2 @ p["wm"] + p["bm"])
    std = jnp.exp(h2 @ p["ws"] + p["bs"])
    return mean, std


def reference_forward_bf16(x, p):
    """Same math as the kernel: bf16 dot operands, f32 accumulation/elementwise."""
    def dot(a, w):
        return jnp.dot(a.astype(jnp.bfloat16), w.astype(jnp.bfloat16),
                       preferred_element_type=jnp.float32)
    h1 = jnp.maximum(dot(x, p["w1"]) + p["b1"], 0.0)
    h2 = jnp.maximum(dot(h1, p["w2"]) + p["b2"], 0.0)
    mean = jnp.tanh(dot(h2, p["wm"]) + p["bm"])
    std = jnp.exp(dot(h2, p["ws"]) + p["bs"])
    return mean, std


if __name__ == "__main__":
    key = jax.random.PRNGKey(0)
    k_params, k_x = jax.random.split(key)

    batch = 8
    input_dim = 16
    output_dim = 8
    hidden_dim = 128

    params = init_params(k_params, input_dim, output_dim, hidden_dim)
    packed = prepare_params(params, output_dim)
    x = jax.random.normal(k_x, (batch, input_dim), jnp.float32)

    mean, std = ppo_policy_forward(x, packed)
    mean = jax.block_until_ready(mean)
    std = jax.block_until_ready(std)

    # Check against a reference doing the same bf16-operand / f32-accum math
    # (kernel stores in bf16, so allow ~1 bf16 ulp of extra rounding).
    ref_mean, ref_std = reference_forward_bf16(x, params)
    assert jnp.allclose(mean, ref_mean, atol=1e-2, rtol=1e-2), "mean mismatch (bf16 ref)"
    assert jnp.allclose(std, ref_std, atol=1e-2, rtol=1e-2), "std mismatch (bf16 ref)"

    # Sanity check against the pure-f32 reference (looser: bf16 weight rounding).
    f32_mean, f32_std = reference_forward_f32(x, params)
    assert jnp.allclose(mean, f32_mean, atol=5e-2, rtol=5e-2), "mean drift (f32 ref)"
    assert jnp.allclose(std, f32_std, atol=5e-2, rtol=5e-2), "std drift (f32 ref)"

    print("KERNEL_OK")
</pallas_src>

<mosaic_0001>
module attributes {stable_mosaic.version = 11 : i64} {
  func.func @ppo_policy_kernel(%arg0: i32, %arg1: memref<8x16xbf16, #tpu.memory_space<vmem>>, %arg2: memref<16x128xbf16, #tpu.memory_space<vmem>>, %arg3: memref<128x128xbf16, #tpu.memory_space<vmem>>, %arg4: memref<128x128xbf16, #tpu.memory_space<vmem>>, %arg5: memref<3x128xf32, #tpu.memory_space<vmem>>, %arg6: memref<8x128xbf16, #tpu.memory_space<vmem>>) attributes {dimension_semantics = [#tpu.dimension_semantics<parallel>], iteration_bounds = array<i64: 1>, scalar_prefetch = 0 : i64, scratch_operands = 0 : i64, tpu.core_type = #tpu.core_type<tc>, window_params = [{transform_indices = @transform_0, window_bounds = array<i64: 8, 16>}, {pipeline_mode = #tpu.pipeline_mode<synchronous>, transform_indices = @transform_1, window_bounds = array<i64: 16, 128>}, {pipeline_mode = #tpu.pipeline_mode<synchronous>, transform_indices = @transform_2, window_bounds = array<i64: 128, 128>}, {pipeline_mode = #tpu.pipeline_mode<synchronous>, transform_indices = @transform_3, window_bounds = array<i64: 128, 128>}, {pipeline_mode = #tpu.pipeline_mode<synchronous>, transform_indices = @transform_4, window_bounds = array<i64: 3, 128>}, {transform_indices = @transform_5, window_bounds = array<i64: 8, 128>}]} {
    %c0 = arith.constant 0 : index
    %c0_0 = arith.constant 0 : index
    %0 = vector.load %arg1[%c0, %c0_0] : memref<8x16xbf16, #tpu.memory_space<vmem>>, vector<8x16xbf16>
    %c0_1 = arith.constant 0 : index
    %c0_2 = arith.constant 0 : index
    %1 = vector.load %arg5[%c0_1, %c0_2] : memref<3x128xf32, #tpu.memory_space<vmem>>, vector<3x128xf32>
    %2 = vector.extract_strided_slice %1 {offsets = [0, 0], sizes = [1, 128], strides = [1, 1]} : vector<3x128xf32> to vector<1x128xf32>
    %3 = vector.extract_strided_slice %1 {offsets = [1, 0], sizes = [1, 128], strides = [1, 1]} : vector<3x128xf32> to vector<1x128xf32>
    %4 = vector.extract_strided_slice %1 {offsets = [2, 0], sizes = [1, 128], strides = [1, 1]} : vector<3x128xf32> to vector<1x128xf32>
    %c0_3 = arith.constant 0 : index
    %c0_4 = arith.constant 0 : index
    %5 = vector.load %arg2[%c0_3, %c0_4] : memref<16x128xbf16, #tpu.memory_space<vmem>>, vector<16x128xbf16>
    %cst = arith.constant dense<0.000000e+00> : vector<8x128xf32>
    %6 = tpu.matmul %0, %5, %cst {dimension_numbers = #tpu.dot_dimension_numbers<[1], [0], [0], [1], [0, 0, 1, 1], [], []>} : vector<8x16xbf16>, vector<16x128xbf16>, vector<8x128xf32> -> vector<8x128xf32>
    %7 = vector.broadcast %2 : vector<1x128xf32> to vector<8x128xf32>
    %8 = arith.addf %6, %7 : vector<8x128xf32>
    %cst_5 = arith.constant 0.000000e+00 : f32
    %9 = vector.broadcast %cst_5 : f32 to vector<8x128xf32>
    %10 = arith.maximumf %8, %9 : vector<8x128xf32>
    %11 = arith.truncf %10 : vector<8x128xf32> to vector<8x128xbf16>
    %c0_6 = arith.constant 0 : index
    %c0_7 = arith.constant 0 : index
    %12 = vector.load %arg3[%c0_6, %c0_7] : memref<128x128xbf16, #tpu.memory_space<vmem>>, vector<128x128xbf16>
    %cst_8 = arith.constant dense<0.000000e+00> : vector<8x128xf32>
    %13 = tpu.matmul %11, %12, %cst_8 {dimension_numbers = #tpu.dot_dimension_numbers<[1], [0], [0], [1], [0, 0, 1, 1], [], []>} : vector<8x128xbf16>, vector<128x128xbf16>, vector<8x128xf32> -> vector<8x128xf32>
    %14 = vector.broadcast %3 : vector<1x128xf32> to vector<8x128xf32>
    %15 = arith.addf %13, %14 : vector<8x128xf32>
    %cst_9 = arith.constant 0.000000e+00 : f32
    %16 = vector.broadcast %cst_9 : f32 to vector<8x128xf32>
    %17 = arith.maximumf %15, %16 : vector<8x128xf32>
    %18 = arith.truncf %17 : vector<8x128xf32> to vector<8x128xbf16>
    %c0_10 = arith.constant 0 : index
    %c0_11 = arith.constant 0 : index
    %19 = vector.load %arg4[%c0_10, %c0_11] : memref<128x128xbf16, #tpu.memory_space<vmem>>, vector<128x128xbf16>
    %cst_12 = arith.constant dense<0.000000e+00> : vector<8x128xf32>
    %20 = tpu.matmul %18, %19, %cst_12 {dimension_numbers = #tpu.dot_dimension_numbers<[1], [0], [0], [1], [0, 0, 1, 1], [], []>} : vector<8x128xbf16>, vector<128x128xbf16>, vector<8x128xf32> -> vector<8x128xf32>
    %21 = vector.broadcast %4 : vector<1x128xf32> to vector<8x128xf32>
    %22 = arith.addf %20, %21 : vector<8x128xf32>
    %23 = tpu.iota {dimensions = array<i32: 1>} : vector<8x128xi32>
    %c8_i32 = arith.constant 8 : i32
    %24 = vector.broadcast %c8_i32 : i32 to vector<8x128xi32>
    %25 = arith.cmpi slt, %23, %24 : vector<8x128xi32>
    %26 = math.tanh %22 : vector<8x128xf32>
    %27 = math.exp %22 : vector<8x128xf32>
    %28 = arith.select %25, %26, %27 : vector<8x128xi1>, vector<8x128xf32>
    %29 = arith.truncf %28 : vector<8x128xf32> to vector<8x128xbf16>
    %c0_13 = arith.constant 0 : index
    %c0_14 = arith.constant 0 : index
    %30 = vector.load %arg6[%c0_13, %c0_14] : memref<8x128xbf16, #tpu.memory_space<vmem>>, vector<8x128xbf16>
    tpu.vector_store %arg6[%c0_13, %c0_14], %29 {strides = array<i32>} : memref<8x128xbf16, #tpu.memory_space<vmem>>, vector<8x128xbf16>,
    return
  }
  func.func @transform_0(%arg0: i32) -> (i32, i32) {
    %c0_i32 = arith.constant 0 : i32
    %c0_i32_0 = arith.constant 0 : i32
    return %arg0, %c0_i32 : i32, i32
  }
  func.func @transform_1(%arg0: i32) -> (i32, i32) {
    %c0_i32 = arith.constant 0 : i32
    %c0_i32_0 = arith.constant 0 : i32
    %c0_i32_1 = arith.constant 0 : i32
    return %c0_i32, %c0_i32_0 : i32, i32
  }
  func.func @transform_2(%arg0: i32) -> (i32, i32) {
    %c0_i32 = arith.constant 0 : i32
    %c0_i32_0 = arith.constant 0 : i32
    %c0_i32_1 = arith.constant 0 : i32
    return %c0_i32, %c0_i32_0 : i32, i32
  }
  func.func @transform_3(%arg0: i32) -> (i32, i32) {
    %c0_i32 = arith.constant 0 : i32
    %c0_i32_0 = arith.constant 0 : i32
    %c0_i32_1 = arith.constant 0 : i32
    return %c0_i32, %c0_i32_0 : i32, i32
  }
  func.func @transform_4(%arg0: i32) -> (i32, i32) {
    %c0_i32 = arith.constant 0 : i32
    %c0_i32_0 = arith.constant 0 : i32
    %c0_i32_1 = arith.constant 0 : i32
    return %c0_i32, %c0_i32_0 : i32, i32
  }
  func.func @transform_5(%arg0: i32) -> (i32, i32) {
    %c0_i32 = arith.constant 0 : i32
    %c0_i32_0 = arith.constant 0 : i32
    return %arg0, %c0_i32 : i32, i32
  }
}

</mosaic_0001>

<llo_original>
// kernel: tpu_custom_call.1
$region0: #{tpu_custom_call.1}
  #allocation0 [shape = 'u32[]', space=smem, size = 0x4, offset = 0x4, fixed_abs, tag = 'smem constant byte address 0x4 - core index']
  #allocation1 [shape = 'u32[144,128]{1,0:T(1,128)}', space=vmem, size = 0x12000, scoped, tag = 'internal scratch']
  %s0 = inlined_call_operand.hbm [shape: bf16[8,16], index: 0, kind: input, shape index: {}]
  %s1 = inlined_call_operand.hbm [shape: bf16[16,128], index: 1, kind: input, shape index: {}]
  %s2 = inlined_call_operand.hbm [shape: bf16[128,128], index: 2, kind: input, shape index: {}]
  %s3 = inlined_call_operand.hbm [shape: bf16[128,128], index: 3, kind: input, shape index: {}]
  %s4 = inlined_call_operand.vmem [shape: f32[3,128], index: 4, kind: input, shape index: {}]
  %s5 = inlined_call_operand.hbm [shape: bf16[8,128], index: 5, kind: output, shape index: {}]
  %s6 = sld [smem:[#allocation0]]
  $region46: #{tpu_custom_call.1} parent=0
    _
  %s8 = ssub.s32 1, %s6
  %s9 = scalar_select 0, %s8, %s6
  $region1: #{tpu_custom_call.1} parent=0
    #allocation2 [shape = 'u8[2048]{0}', space=vmem, size = 0x800, scoped, tag = 'input window, operand 0, single buffered']
    #allocation3 [shape = 's32[1]{0}', space=sflag, size = 0x4, scoped, tag = 'scoped memory for tpu_custom_call.1']
    #allocation4 [shape = 's32[1]{0}', space=sflag, size = 0x4, scoped, tag = 'scoped memory for tpu_custom_call.1']
    #allocation5 [shape = 'u8[4096]{0}', space=vmem, size = 0x1000, scoped, tag = 'input window, operand 1, single buffered']
    #allocation6 [shape = 's32[1]{0}', space=sflag, size = 0x4, scoped, tag = 'scoped memory for tpu_custom_call.1']
    #allocation7 [shape = 'u8[32768]{0}', space=vmem, size = 0x8000, scoped, tag = 'input window, operand 2, single buffered']
    #allocation8 [shape = 'u8[32768]{0}', space=vmem, size = 0x8000, scoped, tag = 'input window, operand 3, single buffered']
    #allocation9 [shape = 's32[1]{0}', space=sflag, size = 0x4, scoped, tag = 'scoped memory for tpu_custom_call.1']
    #allocation10 [shape = 'u8[2048]{0}', space=vmem, size = 0x800, scoped, tag = 'output window, operand 0, single buffered']
    %10 = vsyncpa [#allocation3], 0
    %11 = vsyncpa [#allocation6], 0
    %12 = vsyncpa [#allocation9], 0
    %13 = vsyncpa [#allocation4], 0
    // Predicated region
    $region2: #{tpu_custom_call.1} parent=1 // pred_check
      _
    $region3: #{tpu_custom_call.1} parent=1 // pred_check_branch
      %15 = sbr.rel (0) target = $region5
    $region4: #{tpu_custom_call.1} parent=1 // pred_region
      %s17 = ssub.s32 64, 64
      %18 = vsyncadd [#allocation3], %s17
      %s20 = sshll.u32 [#allocation2], 4
      %s21 = int_to_ptr.vmem [resolvable:$true] %s20
      %23 = dma.hbm_to_vmem [thread:$0]  %s0, 64, %s21, [#allocation3]
    $region5: #{tpu_custom_call.1} parent=1 // pred_fallthru
      _
    // Predicated region
    $region6: #{tpu_custom_call.1} parent=1 // pred_check
      _
    $region7: #{tpu_custom_call.1} parent=1 // pred_check_branch
      %25 = sbr.rel (0) target = $region9
    $region8: #{tpu_custom_call.1} parent=1 // pred_region
      %s27 = ssub.s32 128, 128
      %28 = vsyncadd [#allocation6], %s27
      %s29 = sshll.u32 [#allocation5], 4
      %s30 = int_to_ptr.vmem [resolvable:$true] %s29
      %35 = dma.hbm_to_vmem [thread:$0]  %s1, 128, %s30, [#allocation6], 64, 64, 4
    $region9: #{tpu_custom_call.1} parent=1 // pred_fallthru
      _
    // Predicated region
    $region10: #{tpu_custom_call.1} parent=1 // pred_check
      _
    $region11: #{tpu_custom_call.1} parent=1 // pred_check_branch
      %37 = sbr.rel (0) target = $region13
    $region12: #{tpu_custom_call.1} parent=1 // pred_region
      %s39 = ssub.s32 1024, 1024
      %40 = vsyncadd [#allocation6], %s39
      %s41 = sshll.u32 [#allocation7], 4
      %s42 = int_to_ptr.vmem [resolvable:$true] %s41
      %47 = dma.hbm_to_vmem [thread:$0]  %s2, 1024, %s42, [#allocation6], 64, 64, 4
    $region13: #{tpu_custom_call.1} parent=1 // pred_fallthru
      _
    // Predicated region
    $region14: #{tpu_custom_call.1} parent=1 // pred_check
      _
    $region15: #{tpu_custom_call.1} parent=1 // pred_check_branch
      %49 = sbr.rel (0) target = $region17
    $region16: #{tpu_custom_call.1} parent=1 // pred_region
      %s51 = ssub.s32 1024, 1024
      %52 = vsyncadd [#allocation9], %s51
      %s53 = sshll.u32 [#allocation8], 4
      %s54 = int_to_ptr.vmem [resolvable:$true] %s53
      %59 = dma.hbm_to_vmem [thread:$0]  %s3, 1024, %s54, [#allocation9], 64, 64, 4
    $region17: #{tpu_custom_call.1} parent=1 // pred_fallthru
      _
    // Predicated region
    $region18: #{tpu_custom_call.1} parent=1 // pred_check
      _
    $region19: #{tpu_custom_call.1} parent=1 // pred_check_branch
      %61 = sbr.rel (0) target = $region21
    $region20: #{tpu_custom_call.1} parent=1 // pred_region
      _
    $region21: #{tpu_custom_call.1} parent=1 // pred_fallthru
      _
    // Predicated region
    $region22: #{tpu_custom_call.1} parent=1 // pred_check
      _
    $region23: #{tpu_custom_call.1} parent=1 // pred_check_branch
      %63 = sbr.rel (0) target = $region25
    $region24: #{tpu_custom_call.1} parent=1 // pred_region
      %64 = dma.done [#allocation3], 64
    $region25: #{tpu_custom_call.1} parent=1 // pred_fallthru
      _
    // Predicated region
    $region26: #{tpu_custom_call.1} parent=1 // pred_check
      _
    $region27: #{tpu_custom_call.1} parent=1 // pred_check_branch
      %66 = sbr.rel (0) target = $region29
    $region28: #{tpu_custom_call.1} parent=1 // pred_region
      %67 = dma.done [#allocation6], 128
    $region29: #{tpu_custom_call.1} parent=1 // pred_fallthru
      _
    // Predicated region
    $region30: #{tpu_custom_call.1} parent=1 // pred_check
      _
    $region31: #{tpu_custom_call.1} parent=1 // pred_check_branch
      %69 = sbr.rel (0) target = $region33
    $region32: #{tpu_custom_call.1} parent=1 // pred_region
      %70 = dma.done [#allocation6], 1024
    $region33: #{tpu_custom_call.1} parent=1 // pred_fallthru
      _
    // Predicated region
    $region34: #{tpu_custom_call.1} parent=1 // pred_check
      _
    $region35: #{tpu_custom_call.1} parent=1 // pred_check_branch
      %72 = sbr.rel (0) target = $region37
    $region36: #{tpu_custom_call.1} parent=1 // pred_region
      %73 = dma.done [#allocation9], 1024
    $region37: #{tpu_custom_call.1} parent=1 // pred_fallthru
      _
    %v75 = vld [vmem:[#allocation2] sm:$0xf]
    %v76 = vld [vmem:[%s4] sm:$0x7]
    %v77 = vld [vmem:[#allocation5] sm:$0xf]
    %v78 = vld [vmem:[#allocation5 + $0x4] sm:$0xf]
    %v79 = vlaneseq
    %v80 = vshrl.u32 %v79, 7
    %v81 = vsub.s32 0, %v80
    %v82 = vrot.slane %v76, %v81
    %v85 = vunpack.c.l.b16 %v77
    %v86 = vunpack.c.l.b16 %v78
    %v87 = vpack.c.b16 %v86, %v85
    %vm89 = vcmask 130048
    %v91 = vsel %vm89, %v75, 0
    %93 = vmatprep.subr.bf16.mxu0 0
    %94 = vmatpush1.bf16.msra.mxu0 %v87
    %95 = vmatprep.subr.bf16.mxu0 0
    %96 = vmatpush1.bf16.msra.mxu0 0
    %97 = vmatprep.subr.bf16.mxu0 0
    %98 = vmatpush1.bf16.msra.mxu0 0
    %99 = vmatprep.subr.bf16.mxu0 0
    %100 = vmatpush1.bf16.msra.mxu0 0
    %101 = vmatprep.subr.bf16.mxu0 0
    %102 = vmatpush1.bf16.msra.mxu0 0
    %103 = vmatprep.subr.bf16.mxu0 0
    %104 = vmatpush1.bf16.msra.mxu0 0
    %105 = vmatprep.subr.bf16.mxu0 0
    %106 = vmatpush1.bf16.msra.mxu0 0
    %107 = vmatprep.subr.bf16.mxu0 0
    %108 = vmatpush1.bf16.msra.mxu0 0
    %109 = vmatprep.subr.bf16.mxu0 0
    %110 = vmatpush1.bf16.msra.mxu0 0
    %111 = vmatprep.subr.bf16.mxu0 0
    %112 = vmatpush1.bf16.msra.mxu0 0
    %113 = vmatprep.subr.bf16.mxu0 0
    %114 = vmatpush1.bf16.msra.mxu0 0
    %115 = vmatprep.subr.bf16.mxu0 0
    %116 = vmatpush1.bf16.msra.mxu0 0
    %117 = vmatprep.subr.bf16.mxu0 0
    %118 = vmatpush1.bf16.msra.mxu0 0
    %119 = vmatprep.subr.bf16.mxu0 0
    %120 = vmatpush1.bf16.msra.mxu0 0
    %121 = vmatprep.subr.bf16.mxu0 0
    %122 = vmatpush1.bf16.msra.mxu0 0
    %123 = vmatprep.subr.bf16.mxu0 0
    %124 = vmatpush1.bf16.msra.mxu0 0
    %125 = vmatprep.mubr.bf16.mxu0 0
    %126 = vmatmul.mubr.bf16.gmra.mrb[0].mxu0 %v91
    %v127 = vpop.f32.mrb[0].mxu0
    %v128 = vadd.f32 %v82, %v127
    %v129 = vpop.f32.mrb[0].mxu0
    %v130 = vpop.f32.mrb[0].mxu0
    %v131 = vpop.f32.mrb[0].mxu0
    %132 = vdwg.mxu0
    %v133 = vmax.f32 %v128, 0.0
    %v134 = vpack.c.bf16 %v133, %v133
    %v135 = vld [vmem:[#allocation7] sm:$0xf]
    %v136 = vld [vmem:[#allocation7 + $0x4] sm:$0xf]
    %v137 = vld [vmem:[#allocation7 + $0x8] sm:$0xf]
    %v138 = vld [vmem:[#allocation7 + $0xc] sm:$0xf]
    %v139 = vld [vmem:[#allocation7 + $0x10] sm:$0xf]
    %v140 = vld [vmem:[#allocation7 + $0x14] sm:$0xf]
    %v141 = vld [vmem:[#allocation7 + $0x18] sm:$0xf]
    %v142 = vld [vmem:[#allocation7 + $0x1c] sm:$0xf]
    %v143 = vld [vmem:[#allocation7 + $0x20] sm:$0xf]
    %v144 = vld [vmem:[#allocation7 + $0x24] sm:$0xf]
    %v145 = vld [vmem:[#allocation7 + $0x28] sm:$0xf]
    %v146 = vld [vmem:[#allocation7 + $0x2c] sm:$0xf]
    %v147 = vld [vmem:[#allocation7 + $0x30] sm:$0xf]
    %v148 = vld [vmem:[#allocation7 + $0x34] sm:$0xf]
    %v149 = vld [vmem:[#allocation7 + $0x38] sm:$0xf]
    %v150 = vld [vmem:[#allocation7 + $0x3c] sm:$0xf]
    %v151 = vlaneseq
    %v152 = vshrl.u32 %v151, 7
    %v153 = vsub.s32 1, %v152
    %v154 = vrot.slane %v76, %v153
    %v171 = vunpack.c.l.b16 %v135
    %v172 = vunpack.c.l.b16 %v136
    %v173 = vunpack.c.l.b16 %v137
    %v174 = vunpack.c.l.b16 %v138
    %v175 = vunpack.c.l.b16 %v139
    %v176 = vunpack.c.l.b16 %v140
    %v177 = vunpack.c.l.b16 %v141
    %v178 = vunpack.c.l.b16 %v142
    %v179 = vunpack.c.l.b16 %v143
    %v180 = vunpack.c.l.b16 %v144
    %v181 = vunpack.c.l.b16 %v145
    %v182 = vunpack.c.l.b16 %v146
    %v183 = vunpack.c.l.b16 %v147
    %v184 = vunpack.c.l.b16 %v148
    %v185 = vunpack.c.l.b16 %v149
    %v186 = vunpack.c.l.b16 %v150
    %v187 = vpack.c.b16 %v172, %v171
    %v188 = vpack.c.b16 %v174, %v173
    %v189 = vpack.c.b16 %v176, %v175
    %v190 = vpack.c.b16 %v178, %v177
    %v191 = vpack.c.b16 %v180, %v179
    %v192 = vpack.c.b16 %v182, %v181
    %v193 = vpack.c.b16 %v184, %v183
    %v194 = vpack.c.b16 %v186, %v185
    %203 = vmatprep.subr.bf16.mxu0 0
    %204 = vmatpush1.bf16.msra.mxu0 %v187
    %205 = vmatprep.subr.bf16.mxu0 0
    %206 = vmatpush1.bf16.msra.mxu0 %v188
    %207 = vmatprep.subr.bf16.mxu0 0
    %208 = vmatpush1.bf16.msra.mxu0 %v189
    %209 = vmatprep.subr.bf16.mxu0 0
    %210 = vmatpush1.bf16.msra.mxu0 %v190
    %211 = vmatprep.subr.bf16.mxu0 0
    %212 = vmatpush1.bf16.msra.mxu0 %v191
    %213 = vmatprep.subr.bf16.mxu0 0
    %214 = vmatpush1.bf16.msra.mxu0 %v192
    %215 = vmatprep.subr.bf16.mxu0 0
    %216 = vmatpush1.bf16.msra.mxu0 %v193
    %217 = vmatprep.subr.bf16.mxu0 0
    %218 = vmatpush1.bf16.msra.mxu0 %v194
    %219 = vmatprep.subr.bf16.mxu0 0
    %220 = vmatpush1.bf16.msra.mxu0 0
    %221 = vmatprep.subr.bf16.mxu0 0
    %222 = vmatpush1.bf16.msra.mxu0 0
    %223 = vmatprep.subr.bf16.mxu0 0
    %224 = vmatpush1.bf16.msra.mxu0 0
    %225 = vmatprep.subr.bf16.mxu0 0
    %226 = vmatpush1.bf16.msra.mxu0 0
    %227 = vmatprep.subr.bf16.mxu0 0
    %228 = vmatpush1.bf16.msra.mxu0 0
    %229 = vmatprep.subr.bf16.mxu0 0
    %230 = vmatpush1.bf16.msra.mxu0 0
    %231 = vmatprep.subr.bf16.mxu0 0
    %232 = vmatpush1.bf16.msra.mxu0 0
    %233 = vmatprep.subr.bf16.mxu0 0
    %234 = vmatpush1.bf16.msra.mxu0 0
    %235 = vmatprep.mubr.bf16.mxu0 0
    %236 = vmatmul.mubr.bf16.gmra.mrb[0].mxu0 %v134
    %v237 = vpop.f32.mrb[0].mxu0
    %v238 = vadd.f32 %v154, %v237
    %v239 = vpop.f32.mrb[0].mxu0
    %v240 = vpop.f32.mrb[0].mxu0
    %v241 = vpop.f32.mrb[0].mxu0
    %242 = vdwg.mxu0
    %v243 = vmax.f32 %v238, 0.0
    %v244 = vpack.c.bf16 %v243, %v243
    %v245 = vld [vmem:[#allocation8] sm:$0xf]
    %v246 = vld [vmem:[#allocation8 + $0x4] sm:$0xf]
    %v247 = vld [vmem:[#allocation8 + $0x8] sm:$0xf]
    %v248 = vld [vmem:[#allocation8 + $0xc] sm:$0xf]
    %v249 = vld [vmem:[#allocation8 + $0x10] sm:$0xf]
    %v250 = vld [vmem:[#allocation8 + $0x14] sm:$0xf]
    %v251 = vld [vmem:[#allocation8 + $0x18] sm:$0xf]
    %v252 = vld [vmem:[#allocation8 + $0x1c] sm:$0xf]
    %v253 = vld [vmem:[#allocation8 + $0x20] sm:$0xf]
    %v254 = vld [vmem:[#allocation8 + $0x24] sm:$0xf]
    %v255 = vld [vmem:[#allocation8 + $0x28] sm:$0xf]
    %v256 = vld [vmem:[#allocation8 + $0x2c] sm:$0xf]
    %v257 = vld [vmem:[#allocation8 + $0x30] sm:$0xf]
    %v258 = vld [vmem:[#allocation8 + $0x34] sm:$0xf]
    %v259 = vld [vmem:[#allocation8 + $0x38] sm:$0xf]
    %v260 = vld [vmem:[#allocation8 + $0x3c] sm:$0xf]
    %v261 = vlaneseq
    %v262 = vshrl.u32 %v261, 7
    %v263 = vsub.s32 2, %v262
    %v264 = vrot.slane %v76, %v263
    %v281 = vunpack.c.l.b16 %v245
    %v282 = vunpack.c.l.b16 %v246
    %v283 = vunpack.c.l.b16 %v247
    %v284 = vunpack.c.l.b16 %v248
    %v285 = vunpack.c.l.b16 %v249
    %v286 = vunpack.c.l.b16 %v250
    %v287 = vunpack.c.l.b16 %v251
    %v288 = vunpack.c.l.b16 %v252
    %v289 = vunpack.c.l.b16 %v253
    %v290 = vunpack.c.l.b16 %v254
    %v291 = vunpack.c.l.b16 %v255
    %v292 = vunpack.c.l.b16 %v256
    %v293 = vunpack.c.l.b16 %v257
    %v294 = vunpack.c.l.b16 %v258
    %v295 = vunpack.c.l.b16 %v259
    %v296 = vunpack.c.l.b16 %v260
    %v297 = vpack.c.b16 %v282, %v281
    %v298 = vpack.c.b16 %v284, %v283
    %v299 = vpack.c.b16 %v286, %v285
    %v300 = vpack.c.b16 %v288, %v287
    %v301 = vpack.c.b16 %v290, %v289
    %v302 = vpack.c.b16 %v292, %v291
    %v303 = vpack.c.b16 %v294, %v293
    %v304 = vpack.c.b16 %v296, %v295
    %313 = vmatprep.subr.bf16.mxu0 0
    %314 = vmatpush1.bf16.msra.mxu0 %v297
    %315 = vmatprep.subr.bf16.mxu0 0
    %316 = vmatpush1.bf16.msra.mxu0 %v298
    %317 = vmatprep.subr.bf16.mxu0 0
    %318 = vmatpush1.bf16.msra.mxu0 %v299
    %319 = vmatprep.subr.bf16.mxu0 0
    %320 = vmatpush1.bf16.msra.mxu0 %v300
    %321 = vmatprep.subr.bf16.mxu0 0
    %322 = vmatpush1.bf16.msra.mxu0 %v301
    %323 = vmatprep.subr.bf16.mxu0 0
    %324 = vmatpush1.bf16.msra.mxu0 %v302
    %325 = vmatprep.subr.bf16.mxu0 0
    %326 = vmatpush1.bf16.msra.mxu0 %v303
    %327 = vmatprep.subr.bf16.mxu0 0
    %328 = vmatpush1.bf16.msra.mxu0 %v304
    %329 = vmatprep.subr.bf16.mxu0 0
    %330 = vmatpush1.bf16.msra.mxu0 0
    %331 = vmatprep.subr.bf16.mxu0 0
    %332 = vmatpush1.bf16.msra.mxu0 0
    %333 = vmatprep.subr.bf16.mxu0 0
    %334 = vmatpush1.bf16.msra.mxu0 0
    %335 = vmatprep.subr.bf16.mxu0 0
    %336 = vmatpush1.bf16.msra.mxu0 0
    %337 = vmatprep.subr.bf16.mxu0 0
    %338 = vmatpush1.bf16.msra.mxu0 0
    %339 = vmatprep.subr.bf16.mxu0 0
    %340 = vmatpush1.bf16.msra.mxu0 0
    %341 = vmatprep.subr.bf16.mxu0 0
    %342 = vmatpush1.bf16.msra.mxu0 0
    %343 = vmatprep.subr.bf16.mxu0 0
    %344 = vmatpush1.bf16.msra.mxu0 0
    %345 = vmatprep.mubr.bf16.mxu0 0
    %346 = vmatmul.mubr.bf16.gmra.mrb[0].mxu0 %v244
    %v347 = vpop.f32.mrb[0].mxu0
    %v348 = vadd.f32 %v264, %v347
    %v349 = vpop.f32.mrb[0].mxu0
    %v350 = vpop.f32.mrb[0].mxu0
    %v351 = vpop.f32.mrb[0].mxu0
    %352 = vdwg.mxu0
    %v353 = vlaneseq
    %v354 = vand.u32 %v353, 127
    %vm355 = vcmp.lt.s32.totalorder %v354, 8
    %v356 = vtanh.pop %v348
    %v357 = vmul.f32 %v348, 1.442695
    %v358 = vpow.pop %v357
    %v359 = vsel %vm355, %v356, %v358
    %v360 = vpack.c.bf16 %v359, %v359
    %361 = vst [vmem:[#allocation10] sm:$0xf] %v360
    // Predicated region
    $region38: #{tpu_custom_call.1} parent=1 // pred_check
      _
    $region39: #{tpu_custom_call.1} parent=1 // pred_check_branch
      %363 = sbr.rel (0) target = $region41
    $region40: #{tpu_custom_call.1} parent=1 // pred_region
      %s365 = ssub.s32 64, 64
      %366 = vsyncadd [#allocation4], %s365
      %s368 = sshll.u32 [#allocation10], 4
      %s369 = int_to_ptr.vmem [resolvable:$true] %s368
      %371 = dma.vmem_to_hbm [thread:$0]  %s369, 64, %s5, [#allocation4]
    $region41: #{tpu_custom_call.1} parent=1 // pred_fallthru
      _
    // Predicated region
    $region42: #{tpu_custom_call.1} parent=1 // pred_check
      _
    $region43: #{tpu_custom_call.1} parent=1 // pred_check_branch
      %373 = sbr.rel (0) target = $region45
    $region44: #{tpu_custom_call.1} parent=1 // pred_region
      %374 = dma.done [#allocation4], 64
    $region45: #{tpu_custom_call.1} parent=1 // pred_fallthru
      _
    %375 = vsyncpa [#allocation3], 1
    %376 = vsyncpa [#allocation6], 1
    %377 = vsyncpa [#allocation9], 1
    %378 = vsyncpa [#allocation4], 1

</llo_original>
